<compile_context>
chip_gen: v6e
topology: v6e:2x2x1
jax: 0.10.0
libtpu: 0.0.40
codegen_flags: <defaults>
</compile_context>

<pallas_src>
import numpy as np
import jax
import jax.numpy as jnp
from jax.experimental import pallas as pl
from jax.experimental.pallas import tpu as pltpu

# ---- problem sizes (small, consistent with the module) ----
B = 2            # batch
N = 8            # sequence length
DIM = 32         # model dim
DIM_HEAD = 16    # per-head dim
HEADS = 4        # number of heads
INNER_DIM = DIM_HEAD * HEADS
EPS = 1e-5       # F.layer_norm default eps
SCALE = DIM_HEAD ** (-0.5)


def _layer_norm(x, gamma):
    # gamma: (1, D) broadcasting against x: (rows, D); beta is zero in the module.
    mu = jnp.mean(x, axis=-1, keepdims=True)
    var = jnp.mean(jnp.square(x - mu), axis=-1, keepdims=True)
    return (x - mu) * jax.lax.rsqrt(var + EPS) * gamma


def attention_kernel(x_ref, wq_ref, wkv_ref, nullkv_ref, wo_ref,
                     g_in_ref, g_out_ref, o_ref, merged_ref):
    # Single invocation: the whole (B*N, D) problem lives in VMEM.
    x = x_ref[...]                                 # (B*N, D)
    xn = _layer_norm(x, g_in_ref[...])             # (B*N, D)

    # Shared projections for all batch elements; softmax scale hoisted (one mul).
    q = jnp.dot(xn, wq_ref[...], preferred_element_type=jnp.float32) * SCALE  # (B*N, H*Dh)
    kv = jnp.dot(xn, wkv_ref[...], preferred_element_type=jnp.float32)        # (B*N, 2*Dh)
    k = kv[:, :DIM_HEAD]                           # (B*N, Dh)  shared across heads
    v = kv[:, DIM_HEAD:]                           # (B*N, Dh)

    nk = nullkv_ref[0:1, :]                        # (1, Dh)  null key
    nv = nullkv_ref[1:2, :]                        # (1, Dh)  null value

    for b in range(B):                             # B=2, fully unrolled, one kernel call
        r0, r1 = b * N, (b + 1) * N
        q_b = q[r0:r1, :]                          # (N, H*Dh)
        k_b = k[r0:r1, :]                          # (N, Dh)
        v_b = v[r0:r1, :]                          # (N, Dh)

        # Stack all heads along sublanes -> one score matmul / softmax / AV matmul
        # for every head of this batch element.  Row index = h*N + n.
        qh = jnp.concatenate(
            [q_b[:, h * DIM_HEAD:(h + 1) * DIM_HEAD] for h in range(HEADS)],
            axis=0)                                # (H*N, Dh)

        sim = jnp.dot(qh, k_b.T, preferred_element_type=jnp.float32)   # (H*N, N)
        sim_null = jnp.sum(qh * nk, axis=-1, keepdims=True)            # (H*N, 1)

        # softmax over the (null + N) keys for all heads at once (f32, concat-free).
        m = jnp.maximum(jnp.max(sim, axis=-1, keepdims=True), sim_null)
        e = jnp.exp(sim - m)                                            # (H*N, N)
        e_null = jnp.exp(sim_null - m)                                  # (H*N, 1)
        denom = jnp.sum(e, axis=-1, keepdims=True) + e_null             # (H*N, 1)

        out_b = (jnp.dot(e, v_b, preferred_element_type=jnp.float32)
                 + e_null * nv) / denom                                 # (H*N, Dh)

        # Merge heads back to (N, H*Dh) layout in a VMEM scratch (static slices).
        for h in range(HEADS):
            merged_ref[r0:r1, h * DIM_HEAD:(h + 1) * DIM_HEAD] = \
                out_b[h * N:(h + 1) * N, :]

    # One fused output projection + final LayerNorm for the whole batch.
    proj = jnp.dot(merged_ref[...], wo_ref[...],
                   preferred_element_type=jnp.float32)                  # (B*N, D)
    o_ref[...] = _layer_norm(proj, g_out_ref[...])


def attention_forward(x, wq, wkv, null_kv, wo, g_in, g_out):
    b, n, d = x.shape
    bn = b * n
    x2d = x.reshape(bn, d)                         # free, contiguous reshape
    out2d = pl.pallas_call(
        attention_kernel,
        out_shape=jax.ShapeDtypeStruct((bn, d), jnp.float32),
        grid_spec=pltpu.PrefetchScalarGridSpec(
            num_scalar_prefetch=0,
            grid=(1,),                             # collapsed: single invocation
            in_specs=[
                pl.BlockSpec((bn, d), lambda i: (0, 0)),            # x (flattened)
                pl.BlockSpec((d, INNER_DIM), lambda i: (0, 0)),     # Wq
                pl.BlockSpec((d, 2 * DIM_HEAD), lambda i: (0, 0)),  # Wkv
                pl.BlockSpec((2, DIM_HEAD), lambda i: (0, 0)),      # null_kv
                pl.BlockSpec((INNER_DIM, d), lambda i: (0, 0)),     # Wo
                pl.BlockSpec((1, d), lambda i: (0, 0)),             # gamma (input LN)
                pl.BlockSpec((1, d), lambda i: (0, 0)),             # gamma (output LN)
            ],
            out_specs=pl.BlockSpec((bn, d), lambda i: (0, 0)),
            scratch_shapes=[pltpu.VMEM((bn, INNER_DIM), jnp.float32)],
        ),
        compiler_params=pltpu.CompilerParams(
            dimension_semantics=("arbitrary",)),
    )(x2d, wq, wkv, null_kv, wo, g_in, g_out)
    return out2d.reshape(b, n, d)


def attention_ref(x, wq, wkv, null_kv, wo, g_in, g_out):
    """Pure-JAX reference mirroring the PyTorch forward."""
    def ln(t, g):
        mu = jnp.mean(t, axis=-1, keepdims=True)
        var = jnp.mean(jnp.square(t - mu), axis=-1, keepdims=True)
        return (t - mu) * jax.lax.rsqrt(var + EPS) * g

    b, n, _ = x.shape
    xn = ln(x, g_in[0])
    q = xn @ wq
    kv = xn @ wkv
    k, v = kv[..., :DIM_HEAD], kv[..., DIM_HEAD:]
    q = q.reshape(b, n, HEADS, DIM_HEAD).transpose(0, 2, 1, 3) * SCALE
    nk = jnp.broadcast_to(null_kv[0], (b, 1, DIM_HEAD))
    nv = jnp.broadcast_to(null_kv[1], (b, 1, DIM_HEAD))
    k = jnp.concatenate([nk, k], axis=1)
    v = jnp.concatenate([nv, v], axis=1)
    sim = jnp.einsum('bhid,bjd->bhij', q, k)
    attn = jax.nn.softmax(sim.astype(jnp.float32), axis=-1)
    out = jnp.einsum('bhij,bjd->bhid', attn, v)
    out = out.transpose(0, 2, 1, 3).reshape(b, n, INNER_DIM)
    out = out @ wo
    return ln(out, g_out[0])


if __name__ == "__main__":
    key = jax.random.PRNGKey(0)
    kx, kq, kkv, knull, ko = jax.random.split(key, 5)

    x = jax.random.normal(kx, (B, N, DIM), dtype=jnp.float32)

    # Deterministic synthetic parameters (shapes from Attention.__init__).
    wq = jax.random.normal(kq, (DIM, INNER_DIM), dtype=jnp.float32) * 0.05
    wkv = jax.random.normal(kkv, (DIM, 2 * DIM_HEAD), dtype=jnp.float32) * 0.05
    null_kv = jax.random.normal(knull, (2, DIM_HEAD), dtype=jnp.float32)
    wo = jax.random.normal(ko, (INNER_DIM, DIM), dtype=jnp.float32) * 0.05
    g_in = jnp.ones((1, DIM), dtype=jnp.float32)    # LayerNorm gamma (input norm)
    g_out = jnp.ones((1, DIM), dtype=jnp.float32)   # LayerNorm gamma (to_out norm)

    out = attention_forward(x, wq, wkv, null_kv, wo, g_in, g_out)
    out = jax.block_until_ready(out)

    ref = attention_ref(x, wq, wkv, null_kv, wo, g_in, g_out)
    np.testing.assert_allclose(np.asarray(out), np.asarray(ref),
                               rtol=1e-4, atol=1e-4)
    print("KERNEL_OK")
</pallas_src>

<mosaic_0001>
module attributes {stable_mosaic.version = 11 : i64} {
  func.func @attention_kernel(%arg0: i32, %arg1: memref<16x32xf32, #tpu.memory_space<vmem>>, %arg2: memref<32x64xf32, #tpu.memory_space<vmem>>, %arg3: memref<32x32xf32, #tpu.memory_space<vmem>>, %arg4: memref<2x16xf32, #tpu.memory_space<vmem>>, %arg5: memref<64x32xf32, #tpu.memory_space<vmem>>, %arg6: memref<1x32xf32, #tpu.memory_space<vmem>>, %arg7: memref<1x32xf32, #tpu.memory_space<vmem>>, %arg8: memref<16x32xf32, #tpu.memory_space<vmem>>, %arg9: memref<16x64xf32, #tpu.memory_space<vmem>>) attributes {dimension_semantics = [#tpu.dimension_semantics<arbitrary>], iteration_bounds = array<i64: 1>, scalar_prefetch = 0 : i64, scratch_operands = 1 : i64, tpu.core_type = #tpu.core_type<tc>, window_params = [{pipeline_mode = #tpu.pipeline_mode<synchronous>, transform_indices = @transform_0, window_bounds = array<i64: 16, 32>}, {pipeline_mode = #tpu.pipeline_mode<synchronous>, transform_indices = @transform_1, window_bounds = array<i64: 32, 64>}, {pipeline_mode = #tpu.pipeline_mode<synchronous>, transform_indices = @transform_2, window_bounds = array<i64: 32, 32>}, {pipeline_mode = #tpu.pipeline_mode<synchronous>, transform_indices = @transform_3, window_bounds = array<i64: 2, 16>}, {pipeline_mode = #tpu.pipeline_mode<synchronous>, transform_indices = @transform_4, window_bounds = array<i64: 64, 32>}, {pipeline_mode = #tpu.pipeline_mode<synchronous>, transform_indices = @transform_5, window_bounds = array<i64: 1, 32>}, {pipeline_mode = #tpu.pipeline_mode<synchronous>, transform_indices = @transform_6, window_bounds = array<i64: 1, 32>}, {pipeline_mode = #tpu.pipeline_mode<synchronous>, transform_indices = @transform_7, window_bounds = array<i64: 16, 32>}]} {
    %c0 = arith.constant 0 : index
    %c0_0 = arith.constant 0 : index
    %0 = vector.load %arg1[%c0, %c0_0] : memref<16x32xf32, #tpu.memory_space<vmem>>, vector<16x32xf32>
    %c0_1 = arith.constant 0 : index
    %c0_2 = arith.constant 0 : index
    %1 = vector.load %arg6[%c0_1, %c0_2] : memref<1x32xf32, #tpu.memory_space<vmem>>, vector<1x32xf32>
    %cst = arith.constant dense<0.000000e+00> : vector<16xf32>
    %2 = vector.multi_reduction <add>, %0, %cst [1] : vector<16x32xf32> to vector<16xf32>
    %3 = vector.shape_cast %2 : vector<16xf32> to vector<16x1xf32>
    %cst_3 = arith.constant 3.200000e+01 : f32
    %4 = vector.broadcast %cst_3 : f32 to vector<16x1xf32>
    %5 = arith.divf %3, %4 : vector<16x1xf32>
    %6 = vector.broadcast %5 : vector<16x1xf32> to vector<16x32xf32>
    %7 = arith.subf %0, %6 : vector<16x32xf32>
    %8 = arith.mulf %7, %7 : vector<16x32xf32>
    %cst_4 = arith.constant dense<0.000000e+00> : vector<16xf32>
    %9 = vector.multi_reduction <add>, %8, %cst_4 [1] : vector<16x32xf32> to vector<16xf32>
    %10 = vector.shape_cast %9 : vector<16xf32> to vector<16x1xf32>
    %cst_5 = arith.constant 3.200000e+01 : f32
    %11 = vector.broadcast %cst_5 : f32 to vector<16x1xf32>
    %12 = arith.divf %10, %11 : vector<16x1xf32>
    %13 = vector.broadcast %5 : vector<16x1xf32> to vector<16x32xf32>
    %14 = arith.subf %0, %13 : vector<16x32xf32>
    %cst_6 = arith.constant 9.99999974E-6 : f32
    %15 = vector.broadcast %cst_6 : f32 to vector<16x1xf32>
    %16 = arith.addf %12, %15 : vector<16x1xf32>
    %17 = math.rsqrt %16 : vector<16x1xf32>
    %18 = vector.broadcast %17 : vector<16x1xf32> to vector<16x32xf32>
    %19 = arith.mulf %14, %18 : vector<16x32xf32>
    %20 = vector.broadcast %1 : vector<1x32xf32> to vector<16x32xf32>
    %21 = arith.mulf %19, %20 : vector<16x32xf32>
    %c0_7 = arith.constant 0 : index
    %c0_8 = arith.constant 0 : index
    %22 = vector.load %arg2[%c0_7, %c0_8] : memref<32x64xf32, #tpu.memory_space<vmem>>, vector<32x64xf32>
    %cst_9 = arith.constant dense<0.000000e+00> : vector<16x64xf32>
    %23 = tpu.matmul %21, %22, %cst_9 {dimension_numbers = #tpu.dot_dimension_numbers<[1], [0], [0], [1], [0, 0, 1, 1], [], []>} : vector<16x32xf32>, vector<32x64xf32>, vector<16x64xf32> -> vector<16x64xf32>
    %cst_10 = arith.constant 2.500000e-01 : f32
    %24 = vector.broadcast %cst_10 : f32 to vector<16x64xf32>
    %25 = arith.mulf %23, %24 : vector<16x64xf32>
    %c0_11 = arith.constant 0 : index
    %c0_12 = arith.constant 0 : index
    %26 = vector.load %arg3[%c0_11, %c0_12] : memref<32x32xf32, #tpu.memory_space<vmem>>, vector<32x32xf32>
    %cst_13 = arith.constant dense<0.000000e+00> : vector<16x32xf32>
    %27 = tpu.matmul %21, %26, %cst_13 {dimension_numbers = #tpu.dot_dimension_numbers<[1], [0], [0], [1], [0, 0, 1, 1], [], []>} : vector<16x32xf32>, vector<32x32xf32>, vector<16x32xf32> -> vector<16x32xf32>
    %28 = vector.extract_strided_slice %27 {offsets = [0, 0], sizes = [16, 16], strides = [1, 1]} : vector<16x32xf32> to vector<16x16xf32>
    %29 = vector.extract_strided_slice %27 {offsets = [0, 16], sizes = [16, 16], strides = [1, 1]} : vector<16x32xf32> to vector<16x16xf32>
    %c0_14 = arith.constant 0 : index
    %c0_15 = arith.constant 0 : index
    %30 = vector.load %arg4[%c0_14, %c0_15] : memref<2x16xf32, #tpu.memory_space<vmem>>, vector<1x16xf32>
    %c1 = arith.constant 1 : index
    %c0_16 = arith.constant 0 : index
    %31 = vector.load %arg4[%c1, %c0_16] : memref<2x16xf32, #tpu.memory_space<vmem>>, vector<1x16xf32>
    %32 = vector.extract_strided_slice %25 {offsets = [0, 0], sizes = [8, 64], strides = [1, 1]} : vector<16x64xf32> to vector<8x64xf32>
    %33 = vector.extract_strided_slice %28 {offsets = [0, 0], sizes = [8, 16], strides = [1, 1]} : vector<16x16xf32> to vector<8x16xf32>
    %34 = vector.extract_strided_slice %29 {offsets = [0, 0], sizes = [8, 16], strides = [1, 1]} : vector<16x16xf32> to vector<8x16xf32>
    %35 = vector.extract_strided_slice %32 {offsets = [0, 0], sizes = [8, 16], strides = [1, 1]} : vector<8x64xf32> to vector<8x16xf32>
    %36 = vector.extract_strided_slice %32 {offsets = [0, 16], sizes = [8, 16], strides = [1, 1]} : vector<8x64xf32> to vector<8x16xf32>
    %37 = vector.extract_strided_slice %32 {offsets = [0, 32], sizes = [8, 16], strides = [1, 1]} : vector<8x64xf32> to vector<8x16xf32>
    %38 = vector.extract_strided_slice %32 {offsets = [0, 48], sizes = [8, 16], strides = [1, 1]} : vector<8x64xf32> to vector<8x16xf32>
    %39 = tpu.concatenate %35, %36, %37, %38 in 0 : vector<8x16xf32>, vector<8x16xf32>, vector<8x16xf32>, vector<8x16xf32> -> vector<32x16xf32>
    %40 = tpu.transpose %33, [1, 0] : vector<8x16xf32> -> vector<16x8xf32>
    %cst_17 = arith.constant dense<0.000000e+00> : vector<32x8xf32>
    %41 = tpu.matmul %39, %40, %cst_17 {dimension_numbers = #tpu.dot_dimension_numbers<[1], [0], [0], [1], [0, 0, 1, 1], [], []>} : vector<32x16xf32>, vector<16x8xf32>, vector<32x8xf32> -> vector<32x8xf32>
    %42 = vector.broadcast %30 : vector<1x16xf32> to vector<32x16xf32>
    %43 = arith.mulf %39, %42 : vector<32x16xf32>
    %cst_18 = arith.constant dense<0.000000e+00> : vector<32xf32>
    %44 = vector.multi_reduction <add>, %43, %cst_18 [1] : vector<32x16xf32> to vector<32xf32>
    %45 = vector.shape_cast %44 : vector<32xf32> to vector<32x1xf32>
    %cst_19 = arith.constant dense<0xFF800000> : vector<32xf32>
    %46 = vector.multi_reduction <maximumf>, %41, %cst_19 [1] : vector<32x8xf32> to vector<32xf32>
    %47 = vector.shape_cast %46 : vector<32xf32> to vector<32x1xf32>
    %48 = arith.maximumf %47, %45 : vector<32x1xf32>
    %49 = vector.broadcast %48 : vector<32x1xf32> to vector<32x8xf32>
    %50 = arith.subf %41, %49 : vector<32x8xf32>
    %51 = math.exp %50 : vector<32x8xf32>
    %52 = arith.subf %45, %48 : vector<32x1xf32>
    %53 = math.exp %52 : vector<32x1xf32>
    %cst_20 = arith.constant dense<0.000000e+00> : vector<32xf32>
    %54 = vector.multi_reduction <add>, %51, %cst_20 [1] : vector<32x8xf32> to vector<32xf32>
    %55 = vector.shape_cast %54 : vector<32xf32> to vector<32x1xf32>
    %56 = arith.addf %55, %53 : vector<32x1xf32>
    %cst_21 = arith.constant dense<0.000000e+00> : vector<32x16xf32>
    %57 = tpu.matmul %51, %34, %cst_21 {dimension_numbers = #tpu.dot_dimension_numbers<[1], [0], [0], [1], [0, 0, 1, 1], [], []>} : vector<32x8xf32>, vector<8x16xf32>, vector<32x16xf32> -> vector<32x16xf32>
    %58 = vector.broadcast %53 : vector<32x1xf32> to vector<32x16xf32>
    %59 = vector.broadcast %31 : vector<1x16xf32> to vector<32x16xf32>
    %60 = arith.mulf %58, %59 : vector<32x16xf32>
    %61 = arith.addf %57, %60 : vector<32x16xf32>
    %62 = vector.broadcast %56 : vector<32x1xf32> to vector<32x16xf32>
    %63 = arith.divf %61, %62 : vector<32x16xf32>
    %64 = vector.extract_strided_slice %63 {offsets = [0, 0], sizes = [8, 16], strides = [1, 1]} : vector<32x16xf32> to vector<8x16xf32>
    %c0_22 = arith.constant 0 : index
    %c0_23 = arith.constant 0 : index
    %65 = vector.load %arg9[%c0_22, %c0_23] : memref<16x64xf32, #tpu.memory_space<vmem>>, vector<8x16xf32>
    tpu.vector_store %arg9[%c0_22, %c0_23], %64 {strides = array<i32>} : memref<16x64xf32, #tpu.memory_space<vmem>>, vector<8x16xf32>,
    %66 = vector.extract_strided_slice %63 {offsets = [8, 0], sizes = [8, 16], strides = [1, 1]} : vector<32x16xf32> to vector<8x16xf32>
    %c0_24 = arith.constant 0 : index
    %c16 = arith.constant 16 : index
    %67 = vector.load %arg9[%c0_24, %c16] : memref<16x64xf32, #tpu.memory_space<vmem>>, vector<8x16xf32>
    tpu.vector_store %arg9[%c0_24, %c16], %66 {strides = array<i32>} : memref<16x64xf32, #tpu.memory_space<vmem>>, vector<8x16xf32>,
    %68 = vector.extract_strided_slice %63 {offsets = [16, 0], sizes = [8, 16], strides = [1, 1]} : vector<32x16xf32> to vector<8x16xf32>
    %c0_25 = arith.constant 0 : index
    %c32 = arith.constant 32 : index
    %69 = vector.load %arg9[%c0_25, %c32] : memref<16x64xf32, #tpu.memory_space<vmem>>, vector<8x16xf32>
    tpu.vector_store %arg9[%c0_25, %c32], %68 {strides = array<i32>} : memref<16x64xf32, #tpu.memory_space<vmem>>, vector<8x16xf32>,
    %70 = vector.extract_strided_slice %63 {offsets = [24, 0], sizes = [8, 16], strides = [1, 1]} : vector<32x16xf32> to vector<8x16xf32>
    %c0_26 = arith.constant 0 : index
    %c48 = arith.constant 48 : index
    %71 = vector.load %arg9[%c0_26, %c48] : memref<16x64xf32, #tpu.memory_space<vmem>>, vector<8x16xf32>
    tpu.vector_store %arg9[%c0_26, %c48], %70 {strides = array<i32>} : memref<16x64xf32, #tpu.memory_space<vmem>>, vector<8x16xf32>,
    %72 = vector.extract_strided_slice %25 {offsets = [8, 0], sizes = [8, 64], strides = [1, 1]} : vector<16x64xf32> to vector<8x64xf32>
    %73 = vector.extract_strided_slice %28 {offsets = [8, 0], sizes = [8, 16], strides = [1, 1]} : vector<16x16xf32> to vector<8x16xf32>
    %74 = vector.extract_strided_slice %29 {offsets = [8, 0], sizes = [8, 16], strides = [1, 1]} : vector<16x16xf32> to vector<8x16xf32>
    %75 = vector.extract_strided_slice %72 {offsets = [0, 0], sizes = [8, 16], strides = [1, 1]} : vector<8x64xf32> to vector<8x16xf32>
    %76 = vector.extract_strided_slice %72 {offsets = [0, 16], sizes = [8, 16], strides = [1, 1]} : vector<8x64xf32> to vector<8x16xf32>
    %77 = vector.extract_strided_slice %72 {offsets = [0, 32], sizes = [8, 16], strides = [1, 1]} : vector<8x64xf32> to vector<8x16xf32>
    %78 = vector.extract_strided_slice %72 {offsets = [0, 48], sizes = [8, 16], strides = [1, 1]} : vector<8x64xf32> to vector<8x16xf32>
    %79 = tpu.concatenate %75, %76, %77, %78 in 0 : vector<8x16xf32>, vector<8x16xf32>, vector<8x16xf32>, vector<8x16xf32> -> vector<32x16xf32>
    %80 = tpu.transpose %73, [1, 0] : vector<8x16xf32> -> vector<16x8xf32>
    %cst_27 = arith.constant dense<0.000000e+00> : vector<32x8xf32>
    %81 = tpu.matmul %79, %80, %cst_27 {dimension_numbers = #tpu.dot_dimension_numbers<[1], [0], [0], [1], [0, 0, 1, 1], [], []>} : vector<32x16xf32>, vector<16x8xf32>, vector<32x8xf32> -> vector<32x8xf32>
    %82 = vector.broadcast %30 : vector<1x16xf32> to vector<32x16xf32>
    %83 = arith.mulf %79, %82 : vector<32x16xf32>
    %cst_28 = arith.constant dense<0.000000e+00> : vector<32xf32>
    %84 = vector.multi_reduction <add>, %83, %cst_28 [1] : vector<32x16xf32> to vector<32xf32>
    %85 = vector.shape_cast %84 : vector<32xf32> to vector<32x1xf32>
    %cst_29 = arith.constant dense<0xFF800000> : vector<32xf32>
    %86 = vector.multi_reduction <maximumf>, %81, %cst_29 [1] : vector<32x8xf32> to vector<32xf32>
    %87 = vector.shape_cast %86 : vector<32xf32> to vector<32x1xf32>
    %88 = arith.maximumf %87, %85 : vector<32x1xf32>
    %89 = vector.broadcast %88 : vector<32x1xf32> to vector<32x8xf32>
    %90 = arith.subf %81, %89 : vector<32x8xf32>
    %91 = math.exp %90 : vector<32x8xf32>
    %92 = arith.subf %85, %88 : vector<32x1xf32>
    %93 = math.exp %92 : vector<32x1xf32>
    %cst_30 = arith.constant dense<0.000000e+00> : vector<32xf32>
    %94 = vector.multi_reduction <add>, %91, %cst_30 [1] : vector<32x8xf32> to vector<32xf32>
    %95 = vector.shape_cast %94 : vector<32xf32> to vector<32x1xf32>
    %96 = arith.addf %95, %93 : vector<32x1xf32>
    %cst_31 = arith.constant dense<0.000000e+00> : vector<32x16xf32>
    %97 = tpu.matmul %91, %74, %cst_31 {dimension_numbers = #tpu.dot_dimension_numbers<[1], [0], [0], [1], [0, 0, 1, 1], [], []>} : vector<32x8xf32>, vector<8x16xf32>, vector<32x16xf32> -> vector<32x16xf32>
    %98 = vector.broadcast %93 : vector<32x1xf32> to vector<32x16xf32>
    %99 = vector.broadcast %31 : vector<1x16xf32> to vector<32x16xf32>
    %100 = arith.mulf %98, %99 : vector<32x16xf32>
    %101 = arith.addf %97, %100 : vector<32x16xf32>
    %102 = vector.broadcast %96 : vector<32x1xf32> to vector<32x16xf32>
    %103 = arith.divf %101, %102 : vector<32x16xf32>
    %104 = vector.extract_strided_slice %103 {offsets = [0, 0], sizes = [8, 16], strides = [1, 1]} : vector<32x16xf32> to vector<8x16xf32>
    %c8 = arith.constant 8 : index
    %c0_32 = arith.constant 0 : index
    %105 = vector.load %arg9[%c8, %c0_32] : memref<16x64xf32, #tpu.memory_space<vmem>>, vector<8x16xf32>
    tpu.vector_store %arg9[%c8, %c0_32], %104 {strides = array<i32>} : memref<16x64xf32, #tpu.memory_space<vmem>>, vector<8x16xf32>,
    %106 = vector.extract_strided_slice %103 {offsets = [8, 0], sizes = [8, 16], strides = [1, 1]} : vector<32x16xf32> to vector<8x16xf32>
    %c8_33 = arith.constant 8 : index
    %c16_34 = arith.constant 16 : index
    %107 = vector.load %arg9[%c8_33, %c16_34] : memref<16x64xf32, #tpu.memory_space<vmem>>, vector<8x16xf32>
    tpu.vector_store %arg9[%c8_33, %c16_34], %106 {strides = array<i32>} : memref<16x64xf32, #tpu.memory_space<vmem>>, vector<8x16xf32>,
    %108 = vector.extract_strided_slice %103 {offsets = [16, 0], sizes = [8, 16], strides = [1, 1]} : vector<32x16xf32> to vector<8x16xf32>
    %c8_35 = arith.constant 8 : index
    %c32_36 = arith.constant 32 : index
    %109 = vector.load %arg9[%c8_35, %c32_36] : memref<16x64xf32, #tpu.memory_space<vmem>>, vector<8x16xf32>
    tpu.vector_store %arg9[%c8_35, %c32_36], %108 {strides = array<i32>} : memref<16x64xf32, #tpu.memory_space<vmem>>, vector<8x16xf32>,
    %110 = vector.extract_strided_slice %103 {offsets = [24, 0], sizes = [8, 16], strides = [1, 1]} : vector<32x16xf32> to vector<8x16xf32>
    %c8_37 = arith.constant 8 : index
    %c48_38 = arith.constant 48 : index
    %111 = vector.load %arg9[%c8_37, %c48_38] : memref<16x64xf32, #tpu.memory_space<vmem>>, vector<8x16xf32>
    tpu.vector_store %arg9[%c8_37, %c48_38], %110 {strides = array<i32>} : memref<16x64xf32, #tpu.memory_space<vmem>>, vector<8x16xf32>,
    %c0_39 = arith.constant 0 : index
    %c0_40 = arith.constant 0 : index
    %112 = vector.load %arg9[%c0_39, %c0_40] : memref<16x64xf32, #tpu.memory_space<vmem>>, vector<16x64xf32>
    %c0_41 = arith.constant 0 : index
    %c0_42 = arith.constant 0 : index
    %113 = vector.load %arg5[%c0_41, %c0_42] : memref<64x32xf32, #tpu.memory_space<vmem>>, vector<64x32xf32>
    %cst_43 = arith.constant dense<0.000000e+00> : vector<16x32xf32>
    %114 = tpu.matmul %112, %113, %cst_43 {dimension_numbers = #tpu.dot_dimension_numbers<[1], [0], [0], [1], [0, 0, 1, 1], [], []>} : vector<16x64xf32>, vector<64x32xf32>, vector<16x32xf32> -> vector<16x32xf32>
    %c0_44 = arith.constant 0 : index
    %c0_45 = arith.constant 0 : index
    %115 = vector.load %arg7[%c0_44, %c0_45] : memref<1x32xf32, #tpu.memory_space<vmem>>, vector<1x32xf32>
    %cst_46 = arith.constant dense<0.000000e+00> : vector<16xf32>
    %116 = vector.multi_reduction <add>, %114, %cst_46 [1] : vector<16x32xf32> to vector<16xf32>
    %117 = vector.shape_cast %116 : vector<16xf32> to vector<16x1xf32>
    %cst_47 = arith.constant 3.200000e+01 : f32
    %118 = vector.broadcast %cst_47 : f32 to vector<16x1xf32>
    %119 = arith.divf %117, %118 : vector<16x1xf32>
    %120 = vector.broadcast %119 : vector<16x1xf32> to vector<16x32xf32>
    %121 = arith.subf %114, %120 : vector<16x32xf32>
    %122 = arith.mulf %121, %121 : vector<16x32xf32>
    %cst_48 = arith.constant dense<0.000000e+00> : vector<16xf32>
    %123 = vector.multi_reduction <add>, %122, %cst_48 [1] : vector<16x32xf32> to vector<16xf32>
    %124 = vector.shape_cast %123 : vector<16xf32> to vector<16x1xf32>
    %cst_49 = arith.constant 3.200000e+01 : f32
    %125 = vector.broadcast %cst_49 : f32 to vector<16x1xf32>
    %126 = arith.divf %124, %125 : vector<16x1xf32>
    %127 = vector.broadcast %119 : vector<16x1xf32> to vector<16x32xf32>
    %128 = arith.subf %114, %127 : vector<16x32xf32>
    %cst_50 = arith.constant 9.99999974E-6 : f32
    %129 = vector.broadcast %cst_50 : f32 to vector<16x1xf32>
    %130 = arith.addf %126, %129 : vector<16x1xf32>
    %131 = math.rsqrt %130 : vector<16x1xf32>
    %132 = vector.broadcast %131 : vector<16x1xf32> to vector<16x32xf32>
    %133 = arith.mulf %128, %132 : vector<16x32xf32>
    %134 = vector.broadcast %115 : vector<1x32xf32> to vector<16x32xf32>
    %135 = arith.mulf %133, %134 : vector<16x32xf32>
    %c0_51 = arith.constant 0 : index
    %c0_52 = arith.constant 0 : index
    %136 = vector.load %arg8[%c0_51, %c0_52] : memref<16x32xf32, #tpu.memory_space<vmem>>, vector<16x32xf32>
    tpu.vector_store %arg8[%c0_51, %c0_52], %135 {strides = array<i32>} : memref<16x32xf32, #tpu.memory_space<vmem>>, vector<16x32xf32>,
    return
  }
  func.func @transform_0(%arg0: i32) -> (i32, i32) {
    %c0_i32 = arith.constant 0 : i32
    %c0_i32_0 = arith.constant 0 : i32
    %c0_i32_1 = arith.constant 0 : i32
    return %c0_i32, %c0_i32_0 : i32, i32
  }
  func.func @transform_1(%arg0: i32) -> (i32, i32) {
    %c0_i32 = arith.constant 0 : i32
    %c0_i32_0 = arith.constant 0 : i32
    %c0_i32_1 = arith.constant 0 : i32
    return %c0_i32, %c0_i32_0 : i32, i32
  }
  func.func @transform_2(%arg0: i32) -> (i32, i32) {
    %c0_i32 = arith.constant 0 : i32
    %c0_i32_0 = arith.constant 0 : i32
    %c0_i32_1 = arith.constant 0 : i32
    return %c0_i32, %c0_i32_0 : i32, i32
  }
  func.func @transform_3(%arg0: i32) -> (i32, i32) {
    %c0_i32 = arith.constant 0 : i32
    %c0_i32_0 = arith.constant 0 : i32
    %c0_i32_1 = arith.constant 0 : i32
    return %c0_i32, %c0_i32_0 : i32, i32
  }
  func.func @transform_4(%arg0: i32) -> (i32, i32) {
    %c0_i32 = arith.constant 0 : i32
    %c0_i32_0 = arith.constant 0 : i32
    %c0_i32_1 = arith.constant 0 : i32
    return %c0_i32, %c0_i32_0 : i32, i32
  }
  func.func @transform_5(%arg0: i32) -> (i32, i32) {
    %c0_i32 = arith.constant 0 : i32
    %c0_i32_0 = arith.constant 0 : i32
    %c0_i32_1 = arith.constant 0 : i32
    return %c0_i32, %c0_i32_0 : i32, i32
  }
  func.func @transform_6(%arg0: i32) -> (i32, i32) {
    %c0_i32 = arith.constant 0 : i32
    %c0_i32_0 = arith.constant 0 : i32
    %c0_i32_1 = arith.constant 0 : i32
    return %c0_i32, %c0_i32_0 : i32, i32
  }
  func.func @transform_7(%arg0: i32) -> (i32, i32) {
    %c0_i32 = arith.constant 0 : i32
    %c0_i32_0 = arith.constant 0 : i32
    %c0_i32_1 = arith.constant 0 : i32
    return %c0_i32, %c0_i32_0 : i32, i32
  }
}

</mosaic_0001>

<llo_original>
// kernel: tpu_custom_call.1
$region0: #{tpu_custom_call.1}
  #allocation0 [shape = 'u32[]', space=smem, size = 0x4, offset = 0x4, fixed_abs, tag = 'smem constant byte address 0x4 - core index']
  #allocation1 [shape = 'u32[144,128]{1,0:T(1,128)}', space=vmem, size = 0x12000, scoped, tag = 'internal scratch']
  #allocation2 [shape = 'f32[16,64]{1,0:T(8,128)}', space=vmem, size = 0x2000, scoped, tag = 'scratch operand']
  %s0 = inlined_call_operand.vmem [shape: f32[16,32], index: 0, kind: input, shape index: {}]
  %s1 = inlined_call_operand.vmem [shape: f32[32,64], index: 1, kind: input, shape index: {}]
  %s2 = inlined_call_operand.vmem [shape: f32[32,32], index: 2, kind: input, shape index: {}]
  %s3 = inlined_call_operand.vmem [shape: f32[2,16], index: 3, kind: input, shape index: {}]
  %s4 = inlined_call_operand.vmem [shape: f32[64,32], index: 4, kind: input, shape index: {}]
  %s5 = inlined_call_operand.vmem [shape: f32[1,32], index: 5, kind: input, shape index: {}]
  %s6 = inlined_call_operand.vmem [shape: f32[1,32], index: 6, kind: input, shape index: {}]
  %s7 = inlined_call_operand.hbm [shape: f32[16,32], index: 7, kind: output, shape index: {}]
  %s8 = sld [smem:[#allocation0]]
  $region38: #{tpu_custom_call.1} parent=0
    _
  %s10 = ssub.s32 1, %s8
  %s11 = scalar_select 0, %s10, %s8
  $region1: #{tpu_custom_call.1} parent=0
    #allocation3 [shape = 'u8[8192]{0}', space=vmem, size = 0x2000, scoped, tag = 'output window, operand 0, single buffered']
    #allocation4 [shape = 's32[1]{0}', space=sflag, size = 0x4, scoped, tag = 'scoped memory for tpu_custom_call.1']
    %12 = vsyncpa [#allocation4], 0
    // Predicated region
    $region2: #{tpu_custom_call.1} parent=1 // pred_check
      _
    $region3: #{tpu_custom_call.1} parent=1 // pred_check_branch
      %14 = sbr.rel (0) target = $region5
    $region4: #{tpu_custom_call.1} parent=1 // pred_region
      _
    $region5: #{tpu_custom_call.1} parent=1 // pred_fallthru
      _
    // Predicated region
    $region6: #{tpu_custom_call.1} parent=1 // pred_check
      _
    $region7: #{tpu_custom_call.1} parent=1 // pred_check_branch
      %16 = sbr.rel (0) target = $region9
    $region8: #{tpu_custom_call.1} parent=1 // pred_region
      _
    $region9: #{tpu_custom_call.1} parent=1 // pred_fallthru
      _
    // Predicated region
    $region10: #{tpu_custom_call.1} parent=1 // pred_check
      _
    $region11: #{tpu_custom_call.1} parent=1 // pred_check_branch
      %18 = sbr.rel (0) target = $region13
    $region12: #{tpu_custom_call.1} parent=1 // pred_region
      _
    $region13: #{tpu_custom_call.1} parent=1 // pred_fallthru
      _
    // Predicated region
    $region14: #{tpu_custom_call.1} parent=1 // pred_check
      _
    $region15: #{tpu_custom_call.1} parent=1 // pred_check_branch
      %20 = sbr.rel (0) target = $region17
    $region16: #{tpu_custom_call.1} parent=1 // pred_region
      _
    $region17: #{tpu_custom_call.1} parent=1 // pred_fallthru
      _
    // Predicated region
    $region18: #{tpu_custom_call.1} parent=1 // pred_check
      _
    $region19: #{tpu_custom_call.1} parent=1 // pred_check_branch
      %22 = sbr.rel (0) target = $region21
    $region20: #{tpu_custom_call.1} parent=1 // pred_region
      _
    $region21: #{tpu_custom_call.1} parent=1 // pred_fallthru
      _
    // Predicated region
    $region22: #{tpu_custom_call.1} parent=1 // pred_check
      _
    $region23: #{tpu_custom_call.1} parent=1 // pred_check_branch
      %24 = sbr.rel (0) target = $region25
    $region24: #{tpu_custom_call.1} parent=1 // pred_region
      _
    $region25: #{tpu_custom_call.1} parent=1 // pred_fallthru
      _
    // Predicated region
    $region26: #{tpu_custom_call.1} parent=1 // pred_check
      _
    $region27: #{tpu_custom_call.1} parent=1 // pred_check_branch
      %26 = sbr.rel (0) target = $region29
    $region28: #{tpu_custom_call.1} parent=1 // pred_region
      _
    $region29: #{tpu_custom_call.1} parent=1 // pred_fallthru
      _
    %v27 = vld [vmem:[%s0] sm:$0xff]
    %v28 = vld [vmem:[%s0 + $0x8] sm:$0xff]
    %v29 = vld [vmem:[%s5] sm:$0x1]
    %vm30 = vcmask 261120
    %v31 = vsel %vm30, %v27, 0.0
    %32 = vadd.xlane.f32.xlu0 %v31
    %v33 = vpop.xlane.xlu0 %32
    %v34 = vsel %vm30, %v28, 0.0
    %35 = vadd.xlane.f32.xlu0 %v34
    %v36 = vpop.xlane.xlu0 %35
    %v37 = vrcp.pop 32.0
    %v38 = vmul.f32 %v33, %v37
    %v39 = vmul.f32 %v36, %v37
    %v40 = vsub.f32 %v27, %v38
    %v41 = vsub.f32 %v28, %v39
    %v42 = vmul.f32 %v40, %v40
    %v43 = vmul.f32 %v41, %v41
    %v44 = vsel %vm30, %v42, 0.0
    %45 = vadd.xlane.f32.xlu0 %v44
    %v46 = vpop.xlane.xlu0 %45
    %v47 = vsel %vm30, %v43, 0.0
    %48 = vadd.xlane.f32.xlu0 %v47
    %v49 = vpop.xlane.xlu0 %48
    %v50 = vmul.f32 %v46, %v37
    %v51 = vmul.f32 %v49, %v37
    %v52 = vadd.f32 %v50, 1e-05
    %v53 = vadd.f32 %v51, 1e-05
    %v54 = vrsqrt.pop %v52
    %v55 = vrsqrt.pop %v53
    %v56 = vmul.f32 %v40, %v54
    %v57 = vmul.f32 %v41, %v55
    %v59 = vlaneseq
    %v60 = vshrl.u32 %v59, 7
    %v61 = vsub.s32 0, %v60
    %v62 = vrot.slane %v29, %v61
    %v64 = vmul.f32 %v56, %v62
    %v65 = vmul.f32 %v57, %v62
    %v66 = vld [vmem:[%s1] sm:$0xff]
    %v67 = vld [vmem:[%s1 + $0x8] sm:$0xff]
    %v68 = vld [vmem:[%s1 + $0x10] sm:$0xff]
    %v69 = vld [vmem:[%s1 + $0x18] sm:$0xff]
    %v71 = vsel %vm30, %v64, 0
    %v74 = vsel %vm30, %v65, 0
    %76 = vmatprep.subr.mxu0 0.0
    %77 = vmatpush1.msra.mxu0 0.0
    %78 = vmatprep.subr.mxu0 0.0
    %79 = vmatpush1.msra.mxu0 0.0
    %80 = vmatprep.subr.mxu0 0.0
    %81 = vmatpush1.msra.mxu0 0.0
    %82 = vmatprep.subr.mxu0 0.0
    %83 = vmatpush1.msra.mxu0 0.0
    %84 = vmatprep.subr.mxu0 0.0
    %85 = vmatpush1.msra.mxu0 0.0
    %86 = vmatprep.subr.mxu0 0.0
    %87 = vmatpush1.msra.mxu0 0.0
    %88 = vmatprep.subr.mxu0 0.0
    %89 = vmatpush1.msra.mxu0 0.0
    %90 = vmatprep.subr.mxu0 0.0
    %91 = vmatpush1.msra.mxu0 0.0
    %92 = vmatprep.subr.mxu0 0.0
    %93 = vmatpush1.msra.mxu0 0.0
    %94 = vmatprep.subr.mxu0 0.0
    %95 = vmatpush1.msra.mxu0 0.0
    %96 = vmatprep.subr.mxu0 0.0
    %97 = vmatpush1.msra.mxu0 0.0
    %98 = vmatprep.subr.mxu0 0.0
    %99 = vmatpush1.msra.mxu0 0.0
    %100 = vmatprep.subr.mxu0 0.0
    %101 = vmatpush1.msra.mxu0 %v69
    %102 = vmatprep.subr.mxu0 0.0
    %103 = vmatpush1.msra.mxu0 %v68
    %104 = vmatprep.subr.mxu0 0.0
    %105 = vmatpush1.msra.mxu0 %v67
    %106 = vmatprep.subr.mxu0 0.0
    %107 = vmatpush1.msra.mxu0 %v66
    %108 = vmatprep.subr.mxu0 0.0
    %109 = vmatpush2.msra.mxu0 0.0
    %110 = vmatprep.subr.mxu0 0.0
    %111 = vmatpush2.msra.mxu0 0.0
    %112 = vmatprep.subr.mxu0 0.0
    %113 = vmatpush2.msra.mxu0 0.0
    %114 = vmatprep.subr.mxu0 0.0
    %115 = vmatpush2.msra.mxu0 0.0
    %116 = vmatprep.subr.mxu0 0.0
    %117 = vmatpush2.msra.mxu0 0.0
    %118 = vmatprep.subr.mxu0 0.0
    %119 = vmatpush2.msra.mxu0 0.0
    %120 = vmatprep.subr.mxu0 0.0
    %121 = vmatpush2.msra.mxu0 0.0
    %122 = vmatprep.subr.mxu0 0.0
    %123 = vmatpush2.msra.mxu0 0.0
    %124 = vmatprep.subr.mxu0 0.0
    %125 = vmatpush2.msra.mxu0 0.0
    %126 = vmatprep.subr.mxu0 0.0
    %127 = vmatpush2.msra.mxu0 0.0
    %128 = vmatprep.subr.mxu0 0.0
    %129 = vmatpush2.msra.mxu0 0.0
    %130 = vmatprep.subr.mxu0 0.0
    %131 = vmatpush2.msra.mxu0 0.0
    %132 = vmatprep.subr.mxu0 0.0
    %133 = vmatpush2.msra.mxu0 0.0
    %134 = vmatprep.subr.mxu0 0.0
    %135 = vmatpush2.msra.mxu0 0.0
    %136 = vmatprep.subr.mxu0 0.0
    %137 = vmatpush2.msra.mxu0 0.0
    %138 = vmatprep.subr.mxu0 0.0
    %139 = vmatpush2.msra.mxu0 0.0
    %140 = vmatprep.mubr.f32.mxu0 0.0
    %141 = vmatmul.mubr.f32.gmra.mxu0 %v71
    %v142 = vpop.f32.mrf.mxu0
    %v143 = vadd.f32 0.0, %v142
    %v144 = vpop.f32.mrf.mxu0
    %145 = vmatprep.mubr.f32.mxu0 0.0
    %146 = vmatmul.mubr.f32.gmra.mxu0 %v74
    %v147 = vpop.f32.mrf.mxu0
    %v148 = vadd.f32 0.0, %v147
    %v149 = vpop.f32.mrf.mxu0
    %150 = vdwg.mxu0
    %v151 = vmul.f32 %v143, 0.25
    %v152 = vmul.f32 %v148, 0.25
    %v153 = vld [vmem:[%s2] sm:$0xff]
    %v154 = vld [vmem:[%s2 + $0x8] sm:$0xff]
    %v155 = vld [vmem:[%s2 + $0x10] sm:$0xff]
    %v156 = vld [vmem:[%s2 + $0x18] sm:$0xff]
    %157 = vmatprep.subr.mxu0 0.0
    %158 = vmatpush1.msra.mxu0 0.0
    %159 = vmatprep.subr.mxu0 0.0
    %160 = vmatpush1.msra.mxu0 0.0
    %161 = vmatprep.subr.mxu0 0.0
    %162 = vmatpush1.msra.mxu0 0.0
    %163 = vmatprep.subr.mxu0 0.0
    %164 = vmatpush1.msra.mxu0 0.0
    %165 = vmatprep.subr.mxu0 0.0
    %166 = vmatpush1.msra.mxu0 0.0
    %167 = vmatprep.subr.mxu0 0.0
    %168 = vmatpush1.msra.mxu0 0.0
    %169 = vmatprep.subr.mxu0 0.0
    %170 = vmatpush1.msra.mxu0 0.0
    %171 = vmatprep.subr.mxu0 0.0
    %172 = vmatpush1.msra.mxu0 0.0
    %173 = vmatprep.subr.mxu0 0.0
    %174 = vmatpush1.msra.mxu0 0.0
    %175 = vmatprep.subr.mxu0 0.0
    %176 = vmatpush1.msra.mxu0 0.0
    %177 = vmatprep.subr.mxu0 0.0
    %178 = vmatpush1.msra.mxu0 0.0
    %179 = vmatprep.subr.mxu0 0.0
    %180 = vmatpush1.msra.mxu0 0.0
    %181 = vmatprep.subr.mxu0 0.0
    %182 = vmatpush1.msra.mxu0 %v156
    %183 = vmatprep.subr.mxu0 0.0
    %184 = vmatpush1.msra.mxu0 %v155
    %185 = vmatprep.subr.mxu0 0.0
    %186 = vmatpush1.msra.mxu0 %v154
    %187 = vmatprep.subr.mxu0 0.0
    %188 = vmatpush1.msra.mxu0 %v153
    %189 = vmatprep.subr.mxu0 0.0
    %190 = vmatpush2.msra.mxu0 0.0
    %191 = vmatprep.subr.mxu0 0.0
    %192 = vmatpush2.msra.mxu0 0.0
    %193 = vmatprep.subr.mxu0 0.0
    %194 = vmatpush2.msra.mxu0 0.0
    %195 = vmatprep.subr.mxu0 0.0
    %196 = vmatpush2.msra.mxu0 0.0
    %197 = vmatprep.subr.mxu0 0.0
    %198 = vmatpush2.msra.mxu0 0.0
    %199 = vmatprep.subr.mxu0 0.0
    %200 = vmatpush2.msra.mxu0 0.0
    %201 = vmatprep.subr.mxu0 0.0
    %202 = vmatpush2.msra.mxu0 0.0
    %203 = vmatprep.subr.mxu0 0.0
    %204 = vmatpush2.msra.mxu0 0.0
    %205 = vmatprep.subr.mxu0 0.0
    %206 = vmatpush2.msra.mxu0 0.0
    %207 = vmatprep.subr.mxu0 0.0
    %208 = vmatpush2.msra.mxu0 0.0
    %209 = vmatprep.subr.mxu0 0.0
    %210 = vmatpush2.msra.mxu0 0.0
    %211 = vmatprep.subr.mxu0 0.0
    %212 = vmatpush2.msra.mxu0 0.0
    %213 = vmatprep.subr.mxu0 0.0
    %214 = vmatpush2.msra.mxu0 0.0
    %215 = vmatprep.subr.mxu0 0.0
    %216 = vmatpush2.msra.mxu0 0.0
    %217 = vmatprep.subr.mxu0 0.0
    %218 = vmatpush2.msra.mxu0 0.0
    %219 = vmatprep.subr.mxu0 0.0
    %220 = vmatpush2.msra.mxu0 0.0
    %221 = vmatprep.mubr.f32.mxu0 0.0
    %222 = vmatmul.mubr.f32.gmra.mxu0 %v71
    %v223 = vpop.f32.mrf.mxu0
    %v224 = vadd.f32 0.0, %v223
    %v225 = vpop.f32.mrf.mxu0
    %226 = vmatprep.mubr.f32.mxu0 0.0
    %227 = vmatmul.mubr.f32.gmra.mxu0 %v74
    %v228 = vpop.f32.mrf.mxu0
    %v229 = vadd.f32 0.0, %v228
    %v230 = vpop.f32.mrf.mxu0
    %231 = vdwg.mxu0
    %v232 = vld [vmem:[%s3] sm:$0x1]
    %v233 = vld [vmem:[%s3 + $0x1] sm:$0x1]
    %235 = vrot.lane.b32.xlu0 %v151, 112
    %v236 = vpop.permute.xlu0 %235
    %238 = vrot.lane.b32.xlu0 %v151, 96
    %v239 = vpop.permute.xlu0 %238
    %241 = vrot.lane.b32.xlu0 %v151, 80
    %v242 = vpop.permute.xlu0 %241
    %vm244 = vcmask 130048
    %v245 = vsel %vm244, %v151, 0
    %v247 = vsel %vm244, %v236, 0
    %v249 = vsel %vm244, %v239, 0
    %v251 = vsel %vm244, %v242, 0
    %v254 = vsel %vm244, %v224, 0
    %256 = vmatprep.subr.mxu0 0.0
    %257 = vmatpush1.xpose.msra.mxu0 0.0
    %258 = vmatprep.subr.mxu0 0.0
    %259 = vmatpush1.xpose.msra.mxu0 0.0
    %260 = vmatprep.subr.mxu0 0.0
    %261 = vmatpush1.xpose.msra.mxu0 0.0
    %262 = vmatprep.subr.mxu0 0.0
    %263 = vmatpush1.xpose.msra.mxu0 0.0
    %264 = vmatprep.subr.mxu0 0.0
    %265 = vmatpush1.xpose.msra.mxu0 0.0
    %266 = vmatprep.subr.mxu0 0.0
    %267 = vmatpush1.xpose.msra.mxu0 0.0
    %268 = vmatprep.subr.mxu0 0.0
    %269 = vmatpush1.xpose.msra.mxu0 0.0
    %270 = vmatprep.subr.mxu0 0.0
    %271 = vmatpush1.xpose.msra.mxu0 0.0
    %272 = vmatprep.subr.mxu0 0.0
    %273 = vmatpush1.xpose.msra.mxu0 0.0
    %274 = vmatprep.subr.mxu0 0.0
    %275 = vmatpush1.xpose.msra.mxu0 0.0
    %276 = vmatprep.subr.mxu0 0.0
    %277 = vmatpush1.xpose.msra.mxu0 0.0
    %278 = vmatprep.subr.mxu0 0.0
    %279 = vmatpush1.xpose.msra.mxu0 0.0
    %280 = vmatprep.subr.mxu0 0.0
    %281 = vmatpush1.xpose.msra.mxu0 0.0
    %282 = vmatprep.subr.mxu0 0.0
    %283 = vmatpush1.xpose.msra.mxu0 0.0
    %284 = vmatprep.subr.mxu0 0.0
    %285 = vmatpush1.xpose.msra.mxu0 0.0
    %286 = vmatprep.subr.mxu0 0.0
    %287 = vmatpush1.xpose.msra.mxu0 %v254
    %288 = vmatprep.subr.mxu0 0.0
    %289 = vmatpush2.xpose.msra.mxu0 0.0
    %290 = vmatprep.subr.mxu0 0.0
    %291 = vmatpush2.xpose.msra.mxu0 0.0
    %292 = vmatprep.subr.mxu0 0.0
    %293 = vmatpush2.xpose.msra.mxu0 0.0
    %294 = vmatprep.subr.mxu0 0.0
    %295 = vmatpush2.xpose.msra.mxu0 0.0
    %296 = vmatprep.subr.mxu0 0.0
    %297 = vmatpush2.xpose.msra.mxu0 0.0
    %298 = vmatprep.subr.mxu0 0.0
    %299 = vmatpush2.xpose.msra.mxu0 0.0
    %300 = vmatprep.subr.mxu0 0.0
    %301 = vmatpush2.xpose.msra.mxu0 0.0
    %302 = vmatprep.subr.mxu0 0.0
    %303 = vmatpush2.xpose.msra.mxu0 0.0
    %304 = vmatprep.subr.mxu0 0.0
    %305 = vmatpush2.xpose.msra.mxu0 0.0
    %306 = vmatprep.subr.mxu0 0.0
    %307 = vmatpush2.xpose.msra.mxu0 0.0
    %308 = vmatprep.subr.mxu0 0.0
    %309 = vmatpush2.xpose.msra.mxu0 0.0
    %310 = vmatprep.subr.mxu0 0.0
    %311 = vmatpush2.xpose.msra.mxu0 0.0
    %312 = vmatprep.subr.mxu0 0.0
    %313 = vmatpush2.xpose.msra.mxu0 0.0
    %314 = vmatprep.subr.mxu0 0.0
    %315 = vmatpush2.xpose.msra.mxu0 0.0
    %316 = vmatprep.subr.mxu0 0.0
    %317 = vmatpush2.xpose.msra.mxu0 0.0
    %318 = vmatprep.subr.mxu0 0.0
    %319 = vmatpush2.xpose.msra.mxu0 0.0
    %320 = vmatprep.mubr.f32.mxu0 0.0
    %321 = vmatmul.mubr.f32.gmra.mxu0 %v245
    %v322 = vpop.f32.mrf.mxu0
    %v323 = vadd.f32 0.0, %v322
    %v324 = vpop.f32.mrf.mxu0
    %325 = vmatprep.mubr.f32.mxu0 0.0
    %326 = vmatmul.mubr.f32.gmra.mxu0 %v247
    %v327 = vpop.f32.mrf.mxu0
    %v328 = vadd.f32 0.0, %v327
    %v329 = vpop.f32.mrf.mxu0
    %330 = vmatprep.mubr.f32.mxu0 0.0
    %331 = vmatmul.mubr.f32.gmra.mxu0 %v249
    %v332 = vpop.f32.mrf.mxu0
    %v333 = vadd.f32 0.0, %v332
    %v334 = vpop.f32.mrf.mxu0
    %335 = vmatprep.mubr.f32.mxu0 0.0
    %336 = vmatmul.mubr.f32.gmra.mxu0 %v251
    %v337 = vpop.f32.mrf.mxu0
    %v338 = vadd.f32 0.0, %v337
    %v339 = vpop.f32.mrf.mxu0
    %340 = vdwg.mxu0
    %v341 = vlaneseq
    %v342 = vshrl.u32 %v341, 7
    %v343 = vsub.s32 0, %v342
    %v344 = vrot.slane %v232, %v343
    %v345 = vmul.f32 %v151, %v344
    %v346 = vmul.f32 %v236, %v344
    %v347 = vmul.f32 %v239, %v344
    %v348 = vmul.f32 %v242, %v344
    %v349 = vsel %vm244, %v345, 0.0
    %350 = vadd.xlane.f32.xlu0 %v349
    %v351 = vpop.xlane.xlu0 %350
    %v352 = vsel %vm244, %v346, 0.0
    %353 = vadd.xlane.f32.xlu0 %v352
    %v354 = vpop.xlane.xlu0 %353
    %v355 = vsel %vm244, %v347, 0.0
    %356 = vadd.xlane.f32.xlu0 %v355
    %v357 = vpop.xlane.xlu0 %356
    %v358 = vsel %vm244, %v348, 0.0
    %359 = vadd.xlane.f32.xlu0 %v358
    %v360 = vpop.xlane.xlu0 %359
    %vm361 = vcmask 64512
    %v362 = vsel %vm361, %v323, -inf
    %363 = vmax.xlane.f32.xlu0 %v362
    %v364 = vpop.xlane.xlu0 %363
    %v365 = vsel %vm361, %v328, -inf
    %366 = vmax.xlane.f32.xlu0 %v365
    %v367 = vpop.xlane.xlu0 %366
    %v368 = vsel %vm361, %v333, -inf
    %369 = vmax.xlane.f32.xlu0 %v368
    %v370 = vpop.xlane.xlu0 %369
    %v371 = vsel %vm361, %v338, -inf
    %372 = vmax.xlane.f32.xlu0 %v371
    %v373 = vpop.xlane.xlu0 %372
    %v374 = vmax.f32 %v364, %v351
    %v375 = vmax.f32 %v367, %v354
    %v376 = vmax.f32 %v370, %v357
    %v377 = vmax.f32 %v373, %v360
    %v378 = vsub.f32 %v323, %v374
    %v379 = vsub.f32 %v328, %v375
    %v380 = vsub.f32 %v333, %v376
    %v381 = vsub.f32 %v338, %v377
    %v382 = vmul.f32 %v378, 1.442695
    %v383 = vpow.pop %v382
    %v384 = vmul.f32 %v379, 1.442695
    %v385 = vpow.pop %v384
    %v386 = vmul.f32 %v380, 1.442695
    %v387 = vpow.pop %v386
    %v388 = vmul.f32 %v381, 1.442695
    %v389 = vpow.pop %v388
    %v390 = vsub.f32 %v351, %v374
    %v391 = vsub.f32 %v354, %v375
    %v392 = vsub.f32 %v357, %v376
    %v393 = vsub.f32 %v360, %v377
    %v394 = vmul.f32 %v390, 1.442695
    %v395 = vpow.pop %v394
    %v396 = vmul.f32 %v391, 1.442695
    %v397 = vpow.pop %v396
    %v398 = vmul.f32 %v392, 1.442695
    %v399 = vpow.pop %v398
    %v400 = vmul.f32 %v393, 1.442695
    %v401 = vpow.pop %v400
    %v402 = vsel %vm361, %v383, 0.0
    %403 = vadd.xlane.f32.xlu0 %v402
    %v404 = vpop.xlane.xlu0 %403
    %v405 = vsel %vm361, %v385, 0.0
    %406 = vadd.xlane.f32.xlu0 %v405
    %v407 = vpop.xlane.xlu0 %406
    %v408 = vsel %vm361, %v387, 0.0
    %409 = vadd.xlane.f32.xlu0 %v408
    %v410 = vpop.xlane.xlu0 %409
    %v411 = vsel %vm361, %v389, 0.0
    %412 = vadd.xlane.f32.xlu0 %v411
    %v413 = vpop.xlane.xlu0 %412
    %v414 = vadd.f32 %v404, %v395
    %v415 = vadd.f32 %v407, %v397
    %v416 = vadd.f32 %v410, %v399
    %v417 = vadd.f32 %v413, %v401
    %v418 = vlaneseq
    %v419 = vshrl.u32 %v418, 7
    %v420 = vsub.s32 0, %v419
    %v421 = vrot.slane %v233, %v420
    %v422 = vmul.f32 %v395, %v421
    %v423 = vmul.f32 %v397, %v421
    %v424 = vmul.f32 %v399, %v421
    %v425 = vmul.f32 %v401, %v421
    %426 = vrot.lane.b32.xlu0 %v224, 112
    %v427 = vpop.permute.xlu0 %426
    %v430 = vsel %vm361, %v383, 0
    %v433 = vsel %vm361, %v385, 0
    %v436 = vsel %vm361, %v387, 0
    %v439 = vsel %vm361, %v389, 0
    %441 = vmatprep.subr.mxu0 0.0
    %442 = vmatpush1.msra.mxu0 0.0
    %443 = vmatprep.subr.mxu0 0.0
    %444 = vmatpush1.msra.mxu0 0.0
    %445 = vmatprep.subr.mxu0 0.0
    %446 = vmatpush1.msra.mxu0 0.0
    %447 = vmatprep.subr.mxu0 0.0
    %448 = vmatpush1.msra.mxu0 0.0
    %449 = vmatprep.subr.mxu0 0.0
    %450 = vmatpush1.msra.mxu0 0.0
    %451 = vmatprep.subr.mxu0 0.0
    %452 = vmatpush1.msra.mxu0 0.0
    %453 = vmatprep.subr.mxu0 0.0
    %454 = vmatpush1.msra.mxu0 0.0
    %455 = vmatprep.subr.mxu0 0.0
    %456 = vmatpush1.msra.mxu0 0.0
    %457 = vmatprep.subr.mxu0 0.0
    %458 = vmatpush1.msra.mxu0 0.0
    %459 = vmatprep.subr.mxu0 0.0
    %460 = vmatpush1.msra.mxu0 0.0
    %461 = vmatprep.subr.mxu0 0.0
    %462 = vmatpush1.msra.mxu0 0.0
    %463 = vmatprep.subr.mxu0 0.0
    %464 = vmatpush1.msra.mxu0 0.0
    %465 = vmatprep.subr.mxu0 0.0
    %466 = vmatpush1.msra.mxu0 0.0
    %467 = vmatprep.subr.mxu0 0.0
    %468 = vmatpush1.msra.mxu0 0.0
    %469 = vmatprep.subr.mxu0 0.0
    %470 = vmatpush1.msra.mxu0 0.0
    %471 = vmatprep.subr.mxu0 0.0
    %472 = vmatpush1.msra.mxu0 %v427
    %473 = vmatprep.subr.mxu0 0.0
    %474 = vmatpush2.msra.mxu0 0.0
    %475 = vmatprep.subr.mxu0 0.0
    %476 = vmatpush2.msra.mxu0 0.0
    %477 = vmatprep.subr.mxu0 0.0
    %478 = vmatpush2.msra.mxu0 0.0
    %479 = vmatprep.subr.mxu0 0.0
    %480 = vmatpush2.msra.mxu0 0.0
    %481 = vmatprep.subr.mxu0 0.0
    %482 = vmatpush2.msra.mxu0 0.0
    %483 = vmatprep.subr.mxu0 0.0
    %484 = vmatpush2.msra.mxu0 0.0
    %485 = vmatprep.subr.mxu0 0.0
    %486 = vmatpush2.msra.mxu0 0.0
    %487 = vmatprep.subr.mxu0 0.0
    %488 = vmatpush2.msra.mxu0 0.0
    %489 = vmatprep.subr.mxu0 0.0
    %490 = vmatpush2.msra.mxu0 0.0
    %491 = vmatprep.subr.mxu0 0.0
    %492 = vmatpush2.msra.mxu0 0.0
    %493 = vmatprep.subr.mxu0 0.0
    %494 = vmatpush2.msra.mxu0 0.0
    %495 = vmatprep.subr.mxu0 0.0
    %496 = vmatpush2.msra.mxu0 0.0
    %497 = vmatprep.subr.mxu0 0.0
    %498 = vmatpush2.msra.mxu0 0.0
    %499 = vmatprep.subr.mxu0 0.0
    %500 = vmatpush2.msra.mxu0 0.0
    %501 = vmatprep.subr.mxu0 0.0
    %502 = vmatpush2.msra.mxu0 0.0
    %503 = vmatprep.subr.mxu0 0.0
    %504 = vmatpush2.msra.mxu0 0.0
    %505 = vmatprep.mubr.f32.mxu0 0.0
    %506 = vmatmul.mubr.f32.gmra.mxu0 %v430
    %v507 = vpop.f32.mrf.mxu0
    %v508 = vadd.f32 %v422, %v507
    %v509 = vpop.f32.mrf.mxu0
    %510 = vmatprep.mubr.f32.mxu0 0.0
    %511 = vmatmul.mubr.f32.gmra.mxu0 %v433
    %v512 = vpop.f32.mrf.mxu0
    %v513 = vadd.f32 %v423, %v512
    %v514 = vpop.f32.mrf.mxu0
    %515 = vmatprep.mubr.f32.mxu0 0.0
    %516 = vmatmul.mubr.f32.gmra.mxu0 %v436
    %v517 = vpop.f32.mrf.mxu0
    %v518 = vadd.f32 %v424, %v517
    %v519 = vpop.f32.mrf.mxu0
    %520 = vmatprep.mubr.f32.mxu0 0.0
    %521 = vmatmul.mubr.f32.gmra.mxu0 %v439
    %v522 = vpop.f32.mrf.mxu0
    %v523 = vadd.f32 %v425, %v522
    %v524 = vpop.f32.mrf.mxu0
    %525 = vdwg.mxu0
    %v526 = vrcp.pop %v414
    %v527 = vmul.f32 %v508, %v526
    %v528 = vrcp.pop %v415
    %v529 = vmul.f32 %v513, %v528
    %v530 = vrcp.pop %v416
    %v531 = vmul.f32 %v518, %v530
    %v532 = vrcp.pop %v417
    %v533 = vmul.f32 %v523, %v532
    %534 = vst.msk [vmem:[#allocation2] sm:$0xff] %vm244, %v527
    %536 = vrot.lane.b32.xlu0 %v529, 16
    %v537 = vpop.permute.xlu0 %536
    %vm539 = vcmask 261248
    %540 = vst.msk [vmem:[#allocation2] sm:$0xff] %vm539, %v537
    %542 = vrot.lane.b32.xlu0 %v531, 32
    %v543 = vpop.permute.xlu0 %542
    %vm545 = vcmask 392448
    %546 = vst.msk [vmem:[#allocation2] sm:$0xff] %vm545, %v543
    %548 = vrot.lane.b32.xlu0 %v533, 48
    %v549 = vpop.permute.xlu0 %548
    %vm551 = vcmask 523648
    %552 = vst.msk [vmem:[#allocation2] sm:$0xff] %vm551, %v549
    %554 = vrot.lane.b32.xlu0 %v152, 112
    %v555 = vpop.permute.xlu0 %554
    %557 = vrot.lane.b32.xlu0 %v152, 96
    %v558 = vpop.permute.xlu0 %557
    %560 = vrot.lane.b32.xlu0 %v152, 80
    %v561 = vpop.permute.xlu0 %560
    %v563 = vsel %vm244, %v152, 0
    %v565 = vsel %vm244, %v555, 0
    %v567 = vsel %vm244, %v558, 0
    %v569 = vsel %vm244, %v561, 0
    %v572 = vsel %vm244, %v229, 0
    %574 = vmatprep.subr.mxu0 0.0
    %575 = vmatpush1.xpose.msra.mxu0 0.0
    %576 = vmatprep.subr.mxu0 0.0
    %577 = vmatpush1.xpose.msra.mxu0 0.0
    %578 = vmatprep.subr.mxu0 0.0
    %579 = vmatpush1.xpose.msra.mxu0 0.0
    %580 = vmatprep.subr.mxu0 0.0
    %581 = vmatpush1.xpose.msra.mxu0 0.0
    %582 = vmatprep.subr.mxu0 0.0
    %583 = vmatpush1.xpose.msra.mxu0 0.0
    %584 = vmatprep.subr.mxu0 0.0
    %585 = vmatpush1.xpose.msra.mxu0 0.0
    %586 = vmatprep.subr.mxu0 0.0
    %587 = vmatpush1.xpose.msra.mxu0 0.0
    %588 = vmatprep.subr.mxu0 0.0
    %589 = vmatpush1.xpose.msra.mxu0 0.0
    %590 = vmatprep.subr.mxu0 0.0
    %591 = vmatpush1.xpose.msra.mxu0 0.0
    %592 = vmatprep.subr.mxu0 0.0
    %593 = vmatpush1.xpose.msra.mxu0 0.0
    %594 = vmatprep.subr.mxu0 0.0
    %595 = vmatpush1.xpose.msra.mxu0 0.0
    %596 = vmatprep.subr.mxu0 0.0
    %597 = vmatpush1.xpose.msra.mxu0 0.0
    %598 = vmatprep.subr.mxu0 0.0
    %599 = vmatpush1.xpose.msra.mxu0 0.0
    %600 = vmatprep.subr.mxu0 0.0
    %601 = vmatpush1.xpose.msra.mxu0 0.0
    %602 = vmatprep.subr.mxu0 0.0
    %603 = vmatpush1.xpose.msra.mxu0 0.0
    %604 = vmatprep.subr.mxu0 0.0
    %605 = vmatpush1.xpose.msra.mxu0 %v572
    %606 = vmatprep.subr.mxu0 0.0
    %607 = vmatpush2.xpose.msra.mxu0 0.0
    %608 = vmatprep.subr.mxu0 0.0
    %609 = vmatpush2.xpose.msra.mxu0 0.0
    %610 = vmatprep.subr.mxu0 0.0
    %611 = vmatpush2.xpose.msra.mxu0 0.0
    %612 = vmatprep.subr.mxu0 0.0
    %613 = vmatpush2.xpose.msra.mxu0 0.0
    %614 = vmatprep.subr.mxu0 0.0
    %615 = vmatpush2.xpose.msra.mxu0 0.0
    %616 = vmatprep.subr.mxu0 0.0
    %617 = vmatpush2.xpose.msra.mxu0 0.0
    %618 = vmatprep.subr.mxu0 0.0
    %619 = vmatpush2.xpose.msra.mxu0 0.0
    %620 = vmatprep.subr.mxu0 0.0
    %621 = vmatpush2.xpose.msra.mxu0 0.0
    %622 = vmatprep.subr.mxu0 0.0
    %623 = vmatpush2.xpose.msra.mxu0 0.0
    %624 = vmatprep.subr.mxu0 0.0
    %625 = vmatpush2.xpose.msra.mxu0 0.0
    %626 = vmatprep.subr.mxu0 0.0
    %627 = vmatpush2.xpose.msra.mxu0 0.0
    %628 = vmatprep.subr.mxu0 0.0
    %629 = vmatpush2.xpose.msra.mxu0 0.0
    %630 = vmatprep.subr.mxu0 0.0
    %631 = vmatpush2.xpose.msra.mxu0 0.0
    %632 = vmatprep.subr.mxu0 0.0
    %633 = vmatpush2.xpose.msra.mxu0 0.0
    %634 = vmatprep.subr.mxu0 0.0
    %635 = vmatpush2.xpose.msra.mxu0 0.0
    %636 = vmatprep.subr.mxu0 0.0
    %637 = vmatpush2.xpose.msra.mxu0 0.0
    %638 = vmatprep.mubr.f32.mxu0 0.0
    %639 = vmatmul.mubr.f32.gmra.mxu0 %v563
    %v640 = vpop.f32.mrf.mxu0
    %v641 = vadd.f32 0.0, %v640
    %v642 = vpop.f32.mrf.mxu0
    %643 = vmatprep.mubr.f32.mxu0 0.0
    %644 = vmatmul.mubr.f32.gmra.mxu0 %v565
    %v645 = vpop.f32.mrf.mxu0
    %v646 = vadd.f32 0.0, %v645
    %v647 = vpop.f32.mrf.mxu0
    %648 = vmatprep.mubr.f32.mxu0 0.0
    %649 = vmatmul.mubr.f32.gmra.mxu0 %v567
    %v650 = vpop.f32.mrf.mxu0
    %v651 = vadd.f32 0.0, %v650
    %v652 = vpop.f32.mrf.mxu0
    %653 = vmatprep.mubr.f32.mxu0 0.0
    %654 = vmatmul.mubr.f32.gmra.mxu0 %v569
    %v655 = vpop.f32.mrf.mxu0
    %v656 = vadd.f32 0.0, %v655
    %v657 = vpop.f32.mrf.mxu0
    %658 = vdwg.mxu0
    %v659 = vmul.f32 %v152, %v344
    %v660 = vmul.f32 %v555, %v344
    %v661 = vmul.f32 %v558, %v344
    %v662 = vmul.f32 %v561, %v344
    %v663 = vsel %vm244, %v659, 0.0
    %664 = vadd.xlane.f32.xlu0 %v663
    %v665 = vpop.xlane.xlu0 %664
    %v666 = vsel %vm244, %v660, 0.0
    %667 = vadd.xlane.f32.xlu0 %v666
    %v668 = vpop.xlane.xlu0 %667
    %v669 = vsel %vm244, %v661, 0.0
    %670 = vadd.xlane.f32.xlu0 %v669
    %v671 = vpop.xlane.xlu0 %670
    %v672 = vsel %vm244, %v662, 0.0
    %673 = vadd.xlane.f32.xlu0 %v672
    %v674 = vpop.xlane.xlu0 %673
    %v675 = vsel %vm361, %v641, -inf
    %676 = vmax.xlane.f32.xlu0 %v675
    %v677 = vpop.xlane.xlu0 %676
    %v678 = vsel %vm361, %v646, -inf
    %679 = vmax.xlane.f32.xlu0 %v678
    %v680 = vpop.xlane.xlu0 %679
    %v681 = vsel %vm361, %v651, -inf
    %682 = vmax.xlane.f32.xlu0 %v681
    %v683 = vpop.xlane.xlu0 %682
    %v684 = vsel %vm361, %v656, -inf
    %685 = vmax.xlane.f32.xlu0 %v684
    %v686 = vpop.xlane.xlu0 %685
    %v687 = vmax.f32 %v677, %v665
    %v688 = vmax.f32 %v680, %v668
    %v689 = vmax.f32 %v683, %v671
    %v690 = vmax.f32 %v686, %v674
    %v691 = vsub.f32 %v641, %v687
    %v692 = vsub.f32 %v646, %v688
    %v693 = vsub.f32 %v651, %v689
    %v694 = vsub.f32 %v656, %v690
    %v695 = vmul.f32 %v691, 1.442695
    %v696 = vpow.pop %v695
    %v697 = vmul.f32 %v692, 1.442695
    %v698 = vpow.pop %v697
    %v699 = vmul.f32 %v693, 1.442695
    %v700 = vpow.pop %v699
    %v701 = vmul.f32 %v694, 1.442695
    %v702 = vpow.pop %v701
    %v703 = vsub.f32 %v665, %v687
    %v704 = vsub.f32 %v668, %v688
    %v705 = vsub.f32 %v671, %v689
    %v706 = vsub.f32 %v674, %v690
    %v707 = vmul.f32 %v703, 1.442695
    %v708 = vpow.pop %v707
    %v709 = vmul.f32 %v704, 1.442695
    %v710 = vpow.pop %v709
    %v711 = vmul.f32 %v705, 1.442695
    %v712 = vpow.pop %v711
    %v713 = vmul.f32 %v706, 1.442695
    %v714 = vpow.pop %v713
    %v715 = vsel %vm361, %v696, 0.0
    %716 = vadd.xlane.f32.xlu0 %v715
    %v717 = vpop.xlane.xlu0 %716
    %v718 = vsel %vm361, %v698, 0.0
    %719 = vadd.xlane.f32.xlu0 %v718
    %v720 = vpop.xlane.xlu0 %719
    %v721 = vsel %vm361, %v700, 0.0
    %722 = vadd.xlane.f32.xlu0 %v721
    %v723 = vpop.xlane.xlu0 %722
    %v724 = vsel %vm361, %v702, 0.0
    %725 = vadd.xlane.f32.xlu0 %v724
    %v726 = vpop.xlane.xlu0 %725
    %v727 = vadd.f32 %v717, %v708
    %v728 = vadd.f32 %v720, %v710
    %v729 = vadd.f32 %v723, %v712
    %v730 = vadd.f32 %v726, %v714
    %v731 = vmul.f32 %v708, %v421
    %v732 = vmul.f32 %v710, %v421
    %v733 = vmul.f32 %v712, %v421
    %v734 = vmul.f32 %v714, %v421
    %735 = vrot.lane.b32.xlu0 %v229, 112
    %v736 = vpop.permute.xlu0 %735
    %v739 = vsel %vm361, %v696, 0
    %v742 = vsel %vm361, %v698, 0
    %v745 = vsel %vm361, %v700, 0
    %v748 = vsel %vm361, %v702, 0
    %750 = vmatprep.subr.mxu0 0.0
    %751 = vmatpush1.msra.mxu0 0.0
    %752 = vmatprep.subr.mxu0 0.0
    %753 = vmatpush1.msra.mxu0 0.0
    %754 = vmatprep.subr.mxu0 0.0
    %755 = vmatpush1.msra.mxu0 0.0
    %756 = vmatprep.subr.mxu0 0.0
    %757 = vmatpush1.msra.mxu0 0.0
    %758 = vmatprep.subr.mxu0 0.0
    %759 = vmatpush1.msra.mxu0 0.0
    %760 = vmatprep.subr.mxu0 0.0
    %761 = vmatpush1.msra.mxu0 0.0
    %762 = vmatprep.subr.mxu0 0.0
    %763 = vmatpush1.msra.mxu0 0.0
    %764 = vmatprep.subr.mxu0 0.0
    %765 = vmatpush1.msra.mxu0 0.0
    %766 = vmatprep.subr.mxu0 0.0
    %767 = vmatpush1.msra.mxu0 0.0
    %768 = vmatprep.subr.mxu0 0.0
    %769 = vmatpush1.msra.mxu0 0.0
    %770 = vmatprep.subr.mxu0 0.0
    %771 = vmatpush1.msra.mxu0 0.0
    %772 = vmatprep.subr.mxu0 0.0
    %773 = vmatpush1.msra.mxu0 0.0
    %774 = vmatprep.subr.mxu0 0.0
    %775 = vmatpush1.msra.mxu0 0.0
    %776 = vmatprep.subr.mxu0 0.0
    %777 = vmatpush1.msra.mxu0 0.0
    %778 = vmatprep.subr.mxu0 0.0
    %779 = vmatpush1.msra.mxu0 0.0
    %780 = vmatprep.subr.mxu0 0.0
    %781 = vmatpush1.msra.mxu0 %v736
    %782 = vmatprep.subr.mxu0 0.0
    %783 = vmatpush2.msra.mxu0 0.0
    %784 = vmatprep.subr.mxu0 0.0
    %785 = vmatpush2.msra.mxu0 0.0
    %786 = vmatprep.subr.mxu0 0.0
    %787 = vmatpush2.msra.mxu0 0.0
    %788 = vmatprep.subr.mxu0 0.0
    %789 = vmatpush2.msra.mxu0 0.0
    %790 = vmatprep.subr.mxu0 0.0
    %791 = vmatpush2.msra.mxu0 0.0
    %792 = vmatprep.subr.mxu0 0.0
    %793 = vmatpush2.msra.mxu0 0.0
    %794 = vmatprep.subr.mxu0 0.0
    %795 = vmatpush2.msra.mxu0 0.0
    %796 = vmatprep.subr.mxu0 0.0
    %797 = vmatpush2.msra.mxu0 0.0
    %798 = vmatprep.subr.mxu0 0.0
    %799 = vmatpush2.msra.mxu0 0.0
    %800 = vmatprep.subr.mxu0 0.0
    %801 = vmatpush2.msra.mxu0 0.0
    %802 = vmatprep.subr.mxu0 0.0
    %803 = vmatpush2.msra.mxu0 0.0
    %804 = vmatprep.subr.mxu0 0.0
    %805 = vmatpush2.msra.mxu0 0.0
    %806 = vmatprep.subr.mxu0 0.0
    %807 = vmatpush2.msra.mxu0 0.0
    %808 = vmatprep.subr.mxu0 0.0
    %809 = vmatpush2.msra.mxu0 0.0
    %810 = vmatprep.subr.mxu0 0.0
    %811 = vmatpush2.msra.mxu0 0.0
    %812 = vmatprep.subr.mxu0 0.0
    %813 = vmatpush2.msra.mxu0 0.0
    %814 = vmatprep.mubr.f32.mxu0 0.0
    %815 = vmatmul.mubr.f32.gmra.mxu0 %v739
    %v816 = vpop.f32.mrf.mxu0
    %v817 = vadd.f32 %v731, %v816
    %v818 = vpop.f32.mrf.mxu0
    %819 = vmatprep.mubr.f32.mxu0 0.0
    %820 = vmatmul.mubr.f32.gmra.mxu0 %v742
    %v821 = vpop.f32.mrf.mxu0
    %v822 = vadd.f32 %v732, %v821
    %v823 = vpop.f32.mrf.mxu0
    %824 = vmatprep.mubr.f32.mxu0 0.0
    %825 = vmatmul.mubr.f32.gmra.mxu0 %v745
    %v826 = vpop.f32.mrf.mxu0
    %v827 = vadd.f32 %v733, %v826
    %v828 = vpop.f32.mrf.mxu0
    %829 = vmatprep.mubr.f32.mxu0 0.0
    %830 = vmatmul.mubr.f32.gmra.mxu0 %v748
    %v831 = vpop.f32.mrf.mxu0
    %v832 = vadd.f32 %v734, %v831
    %v833 = vpop.f32.mrf.mxu0
    %834 = vdwg.mxu0
    %v835 = vrcp.pop %v727
    %v836 = vmul.f32 %v817, %v835
    %v837 = vrcp.pop %v728
    %v838 = vmul.f32 %v822, %v837
    %v839 = vrcp.pop %v729
    %v840 = vmul.f32 %v827, %v839
    %v841 = vrcp.pop %v730
    %v842 = vmul.f32 %v832, %v841
    %843 = vst.msk [vmem:[#allocation2 + $0x8] sm:$0xff] %vm244, %v836
    %845 = vrot.lane.b32.xlu0 %v838, 16
    %v846 = vpop.permute.xlu0 %845
    %848 = vst.msk [vmem:[#allocation2 + $0x8] sm:$0xff] %vm539, %v846
    %850 = vrot.lane.b32.xlu0 %v840, 32
    %v851 = vpop.permute.xlu0 %850
    %853 = vst.msk [vmem:[#allocation2 + $0x8] sm:$0xff] %vm545, %v851
    %855 = vrot.lane.b32.xlu0 %v842, 48
    %v856 = vpop.permute.xlu0 %855
    %858 = vst.msk [vmem:[#allocation2 + $0x8] sm:$0xff] %vm551, %v856
    %v859 = vld [vmem:[#allocation2] sm:$0xff]
    %v860 = vld [vmem:[#allocation2 + $0x8] sm:$0xff]
    %v861 = vld [vmem:[%s4] sm:$0xff]
    %v862 = vld [vmem:[%s4 + $0x8] sm:$0xff]
    %v863 = vld [vmem:[%s4 + $0x10] sm:$0xff]
    %v864 = vld [vmem:[%s4 + $0x18] sm:$0xff]
    %v865 = vld [vmem:[%s4 + $0x20] sm:$0xff]
    %v866 = vld [vmem:[%s4 + $0x28] sm:$0xff]
    %v867 = vld [vmem:[%s4 + $0x30] sm:$0xff]
    %v868 = vld [vmem:[%s4 + $0x38] sm:$0xff]
    %vm869 = vcmask 523264
    %v871 = vsel %vm869, %v859, 0
    %v874 = vsel %vm869, %v860, 0
    %876 = vmatprep.subr.mxu0 0.0
    %877 = vmatpush1.msra.mxu0 0.0
    %878 = vmatprep.subr.mxu0 0.0
    %879 = vmatpush1.msra.mxu0 0.0
    %880 = vmatprep.subr.mxu0 0.0
    %881 = vmatpush1.msra.mxu0 0.0
    %882 = vmatprep.subr.mxu0 0.0
    %883 = vmatpush1.msra.mxu0 0.0
    %884 = vmatprep.subr.mxu0 0.0
    %885 = vmatpush1.msra.mxu0 0.0
    %886 = vmatprep.subr.mxu0 0.0
    %887 = vmatpush1.msra.mxu0 0.0
    %888 = vmatprep.subr.mxu0 0.0
    %889 = vmatpush1.msra.mxu0 0.0
    %890 = vmatprep.subr.mxu0 0.0
    %891 = vmatpush1.msra.mxu0 0.0
    %892 = vmatprep.subr.mxu0 0.0
    %893 = vmatpush1.msra.mxu0 %v868
    %894 = vmatprep.subr.mxu0 0.0
    %895 = vmatpush1.msra.mxu0 %v867
    %896 = vmatprep.subr.mxu0 0.0
    %897 = vmatpush1.msra.mxu0 %v866
    %898 = vmatprep.subr.mxu0 0.0
    %899 = vmatpush1.msra.mxu0 %v865
    %900 = vmatprep.subr.mxu0 0.0
    %901 = vmatpush1.msra.mxu0 %v864
    %902 = vmatprep.subr.mxu0 0.0
    %903 = vmatpush1.msra.mxu0 %v863
    %904 = vmatprep.subr.mxu0 0.0
    %905 = vmatpush1.msra.mxu0 %v862
    %906 = vmatprep.subr.mxu0 0.0
    %907 = vmatpush1.msra.mxu0 %v861
    %908 = vmatprep.subr.mxu0 0.0
    %909 = vmatpush2.msra.mxu0 0.0
    %910 = vmatprep.subr.mxu0 0.0
    %911 = vmatpush2.msra.mxu0 0.0
    %912 = vmatprep.subr.mxu0 0.0
    %913 = vmatpush2.msra.mxu0 0.0
    %914 = vmatprep.subr.mxu0 0.0
    %915 = vmatpush2.msra.mxu0 0.0
    %916 = vmatprep.subr.mxu0 0.0
    %917 = vmatpush2.msra.mxu0 0.0
    %918 = vmatprep.subr.mxu0 0.0
    %919 = vmatpush2.msra.mxu0 0.0
    %920 = vmatprep.subr.mxu0 0.0
    %921 = vmatpush2.msra.mxu0 0.0
    %922 = vmatprep.subr.mxu0 0.0
    %923 = vmatpush2.msra.mxu0 0.0
    %924 = vmatprep.subr.mxu0 0.0
    %925 = vmatpush2.msra.mxu0 0.0
    %926 = vmatprep.subr.mxu0 0.0
    %927 = vmatpush2.msra.mxu0 0.0
    %928 = vmatprep.subr.mxu0 0.0
    %929 = vmatpush2.msra.mxu0 0.0
    %930 = vmatprep.subr.mxu0 0.0
    %931 = vmatpush2.msra.mxu0 0.0
    %932 = vmatprep.subr.mxu0 0.0
    %933 = vmatpush2.msra.mxu0 0.0
    %934 = vmatprep.subr.mxu0 0.0
    %935 = vmatpush2.msra.mxu0 0.0
    %936 = vmatprep.subr.mxu0 0.0
    %937 = vmatpush2.msra.mxu0 0.0
    %938 = vmatprep.subr.mxu0 0.0
    %939 = vmatpush2.msra.mxu0 0.0
    %940 = vmatprep.mubr.f32.mxu0 0.0
    %941 = vmatmul.mubr.f32.gmra.mxu0 %v871
    %v942 = vpop.f32.mrf.mxu0
    %v943 = vadd.f32 0.0, %v942
    %v944 = vpop.f32.mrf.mxu0
    %945 = vmatprep.mubr.f32.mxu0 0.0
    %946 = vmatmul.mubr.f32.gmra.mxu0 %v874
    %v947 = vpop.f32.mrf.mxu0
    %v948 = vadd.f32 0.0, %v947
    %v949 = vpop.f32.mrf.mxu0
    %950 = vdwg.mxu0
    %v951 = vld [vmem:[%s6] sm:$0x1]
    %v952 = vsel %vm30, %v943, 0.0
    %953 = vadd.xlane.f32.xlu0 %v952
    %v954 = vpop.xlane.xlu0 %953
    %v955 = vsel %vm30, %v948, 0.0
    %956 = vadd.xlane.f32.xlu0 %v955
    %v957 = vpop.xlane.xlu0 %956
    %v958 = vmul.f32 %v954, %v37
    %v959 = vmul.f32 %v957, %v37
    %v960 = vsub.f32 %v943, %v958
    %v961 = vsub.f32 %v948, %v959
    %v962 = vmul.f32 %v960, %v960
    %v963 = vmul.f32 %v961, %v961
    %v964 = vsel %vm30, %v962, 0.0
    %965 = vadd.xlane.f32.xlu0 %v964
    %v966 = vpop.xlane.xlu0 %965
    %v967 = vsel %vm30, %v963, 0.0
    %968 = vadd.xlane.f32.xlu0 %v967
    %v969 = vpop.xlane.xlu0 %968
    %v970 = vmul.f32 %v966, %v37
    %v971 = vmul.f32 %v969, %v37
    %v972 = vadd.f32 %v970, 1e-05
    %v973 = vadd.f32 %v971, 1e-05
    %v974 = vrsqrt.pop %v972
    %v975 = vrsqrt.pop %v973
    %v976 = vmul.f32 %v960, %v974
    %v977 = vmul.f32 %v961, %v975
    %v979 = vlaneseq
    %v980 = vshrl.u32 %v979, 7
    %v981 = vsub.s32 0, %v980
    %v982 = vrot.slane %v951, %v981
    %v984 = vmul.f32 %v976, %v982
    %v985 = vmul.f32 %v977, %v982
    %986 = vst.msk [vmem:[#allocation3] sm:$0xff] %vm30, %v984
    %987 = vst.msk [vmem:[#allocation3 + $0x8] sm:$0xff] %vm30, %v985
    // Predicated region
    $region30: #{tpu_custom_call.1} parent=1 // pred_check
      _
    $region31: #{tpu_custom_call.1} parent=1 // pred_check_branch
      %989 = sbr.rel (0) target = $region33
    $region32: #{tpu_custom_call.1} parent=1 // pred_region
      %s991 = ssub.s32 256, 256
      %992 = vsyncadd [#allocation4], %s991
      %s993 = sshll.u32 [#allocation3], 4
      %s994 = int_to_ptr.vmem [resolvable:$true] %s993
      %999 = dma.vmem_to_hbm [thread:$0]  %s994, 256, %s7, [#allocation4], 128, 128, 8
    $region33: #{tpu_custom_call.1} parent=1 // pred_fallthru
      _
    // Predicated region
    $region34: #{tpu_custom_call.1} parent=1 // pred_check
      _
    $region35: #{tpu_custom_call.1} parent=1 // pred_check_branch
      %1001 = sbr.rel (0) target = $region37
    $region36: #{tpu_custom_call.1} parent=1 // pred_region
      %1002 = dma.done [#allocation4], 256
    $region37: #{tpu_custom_call.1} parent=1 // pred_fallthru
      _
    %1003 = vsyncpa [#allocation4], 1

</llo_original>
